<compile_context>
chip_gen: v5e
topology: v5e:2x2
jax: 0.10.0
libtpu: 0.0.40
codegen_flags: <defaults>
</compile_context>

<pallas_src>
import jax
import jax.numpy as jnp
import numpy as np
from jax.experimental import pallas as pl
from jax.experimental.pallas import tpu as pltpu


def _mad_class_kernel(srcT_ref, wf_ref, dtw_ref, arw_ref, bcw_ref, out_ref):
    """One grid step per class cl.

    srcT_ref : (Ts, cap*C)  bf16  class-grouped source rows, time-major (pads = 0)
    wf_ref   : (cap*C, Tt)  bf16  OT-contracted target W for the same rows (pads = 0)
    dtw_ref  : (Ts, Tt)     f32   DTW plan of this class
    arw_ref  : (1, Ts)      f32   A[cl] * rowsum(DTW[cl])   (precomputed in wrapper)
    bcw_ref  : (1, Tt)      f32   B[cl] * colsum(DTW[cl])   (precomputed in wrapper)
    out_ref  : (1, 1)       f32   per-class OT-weighted l2 partial
    """
    # Per-class Gram: contraction depth K = cap*C (large), not the short time axis.
    g = jnp.dot(srcT_ref[...], wf_ref[...],
                preferred_element_type=jnp.float32)                    # (Ts, Tt)

    # t3 = sum_{t,u} DTW_cl[t,u] * G_cl[t,u]
    t3 = jnp.sum(jnp.sum(g * dtw_ref[...], axis=1, keepdims=True),
                 axis=0, keepdims=True)                                 # (1, 1)

    # t1 + t2: OT row/col weighted C1/C2 terms, fully precomputed per class.
    t12 = (jnp.sum(arw_ref[...], axis=1, keepdims=True)
           + jnp.sum(bcw_ref[...], axis=1, keepdims=True))              # (1, 1)

    out_ref[...] = t12 - 2.0 * t3


def mad_loss_forward(out_conv_source, out_conv_target, labels_source,
                     similarity_CE, OT, DTW, *, alpha, beta, MAD_class=True):
    """Pallas implementation of MAD_loss.forward's compute path.

    The external `MAD` OT/DTW solver (mad.fit / run_for_output) has no definition in
    the reference module, so OT and DTW are taken as precomputed inputs.
    Labels are treated as concrete host values (the PyTorch reference also uses
    `.item()` / `torch.where` on them).
    """
    # TODO(synk): MAD OT/DTW solver (external `MAD` class) and the weight_X /
    # target_prop bookkeeping are not defined in the reference; OT_/DTW_ are
    # supplied as inputs instead of being fit here.
    Ns, C, Ts = out_conv_source.shape
    Nt, Cc, Tt = out_conv_target.shape
    assert C == Cc

    f32 = jnp.float32
    OT = OT.astype(f32)
    DTW = DTW.astype(f32)

    labels_np = np.asarray(labels_source)
    if MAD_class:
        ncls = int(DTW.shape[0])
    else:
        ncls = 1
        DTW = DTW[:1]
        labels_np = np.zeros((Ns,), np.int32)

    # ---- class grouping (host-side, one time): rows of each class, zero-padded -----
    counts = np.bincount(labels_np.astype(np.int64), minlength=ncls)
    cap = max(int(counts.max()), 1)
    cap = int(-(-cap // 8) * 8)                                  # sublane-friendly pad
    perm = np.full((ncls, cap), Ns, dtype=np.int32)              # pad slots -> zero row
    for cl in range(ncls):
        idx = np.nonzero(labels_np == cl)[0]
        perm[cl, :idx.shape[0]] = idx
    perm_flat = jnp.asarray(perm.reshape(-1))

    # ---- one-time, class-independent preprocessing (plain JAX) ---------------------
    src = out_conv_source.astype(f32)
    tgt = out_conv_target.astype(f32)
    ssq = jnp.sum(src ** 2, axis=1)                              # (Ns, Ts)
    tsq = jnp.sum(tgt ** 2, axis=1)                              # (Nt, Tt)
    # W[n,c,u] = sum_m OT[n,m] * tgt[m,c,u]  -- class independent, computed ONCE.
    wf = jnp.einsum('nm,mcu->ncu', OT, tgt)                      # (Ns, C, Tt)

    # class-grouped, zero-padded MXU operands (bf16 operands, f32 accumulation)
    src_pad = jnp.concatenate([src, jnp.zeros((1, C, Ts), f32)], axis=0)
    wf_pad = jnp.concatenate([wf, jnp.zeros((1, C, Tt), f32)], axis=0)
    srcg = src_pad[perm_flat].reshape(ncls, cap * C, Ts)
    wfg = wf_pad[perm_flat].reshape(ncls, cap * C, Tt).astype(jnp.bfloat16)
    srcgT = jnp.transpose(srcg, (0, 2, 1)).astype(jnp.bfloat16)  # (ncls, Ts, cap*C)

    # OT-weighted C1/C2 terms folded with precomputed DTW row/col sums (per class)
    masks = jnp.asarray(
        (labels_np[None, :] == np.arange(ncls)[:, None]).astype(np.float32))  # (ncls, Ns)
    rowsum_OT = jnp.sum(OT, axis=1)                              # (Ns,)
    A = (masks * rowsum_OT[None, :]) @ ssq                       # (ncls, Ts)
    B = (masks @ OT) @ tsq                                       # (ncls, Tt)
    rw = jnp.sum(DTW, axis=2)                                    # (ncls, Ts)
    cw = jnp.sum(DTW, axis=1)                                    # (ncls, Tt)
    arw = (A * rw)[:, None, :]                                   # (ncls, 1, Ts)
    bcw = (B * cw)[:, None, :]                                   # (ncls, 1, Tt)

    # ---- per-class Pallas kernel ----------------------------------------------------
    # TODO(synk): for very large per-class row counts (cap*C), add a second 'parallel'
    # row-tile grid axis emitting per-tile partials (also covers MAD_class=False on v7x).
    block_bytes = (2 * (Ts * cap * C + cap * C * Tt)             # bf16 MXU operands
                   + 4 * (Ts * Tt + Ts + Tt + 1))                # f32 plan / rows / out
    try:
        vmem_cap = int(pltpu.get_tpu_info().vmem_capacity_bytes)
    except Exception:
        vmem_cap = 64 * 1024 * 1024                              # conservative (v7x)
    vmem_limit = int(min(max(4 * block_bytes, 32 * 1024 * 1024),
                         int(0.8 * vmem_cap)))

    grid_spec = pltpu.PrefetchScalarGridSpec(
        num_scalar_prefetch=0,
        grid=(ncls,),
        in_specs=[
            pl.BlockSpec((None, Ts, cap * C), lambda cl: (cl, 0, 0)),   # srcT of class
            pl.BlockSpec((None, cap * C, Tt), lambda cl: (cl, 0, 0)),   # W of class
            pl.BlockSpec((None, Ts, Tt), lambda cl: (cl, 0, 0)),        # DTW plan
            pl.BlockSpec((None, 1, Ts), lambda cl: (cl, 0, 0)),         # A[cl]*rw[cl]
            pl.BlockSpec((None, 1, Tt), lambda cl: (cl, 0, 0)),         # B[cl]*cw[cl]
        ],
        out_specs=pl.BlockSpec((None, 1, 1), lambda cl: (cl, 0, 0)),
    )

    partials = pl.pallas_call(
        _mad_class_kernel,
        out_shape=jax.ShapeDtypeStruct((ncls, 1, 1), jnp.float32),
        grid_spec=grid_spec,
        compiler_params=pltpu.CompilerParams(
            dimension_semantics=("parallel",),   # independent per-class partials
            vmem_limit_bytes=vmem_limit),
    )(srcgT, wfg, DTW, arw, bcw)

    length = (Ts + Tt) / 2.0
    alpha_loss = alpha * jnp.sum(partials) / length
    # Grid-invariant term: computed once in plain JAX.
    beta_loss = beta * jnp.sum(OT * similarity_CE.astype(f32))
    return alpha_loss, beta_loss, OT, DTW


def _reference(src, tgt, labels, CE, OT, DTW, alpha, beta):
    """Plain-JAX port of l2_torch + forward (for verification)."""
    Ns, C, Ts = src.shape
    Nt, _, Tt = tgt.shape
    ncls = DTW.shape[0]
    ssq = jnp.sum(src ** 2, axis=1)          # (Ns, Ts)
    tsq = jnp.sum(tgt ** 2, axis=1)          # (Nt, Tt)
    gl = jnp.zeros((Ns, Nt), jnp.float32)
    for cl in range(ncls):
        pi = DTW[cl]
        C1 = ssq @ jnp.sum(pi, axis=1)                       # (Ns,)
        C2 = tsq @ jnp.sum(pi, axis=0)                       # (Nt,)
        sp = jnp.einsum('nct,tu->ncu', src, pi)
        C3 = jnp.tensordot(sp, tgt, axes=([1, 2], [1, 2]))   # (Ns, Nt)
        C4 = C1[:, None] + C2[None, :] - 2.0 * C3
        gl = jnp.where((labels == cl)[:, None], C4, gl)
    l2_OT = OT * gl
    length = (Ts + Tt) / 2.0
    return alpha * l2_OT.sum() / length, beta * (OT * CE).sum()


if __name__ == "__main__":
    Ns, Nt, C, Ts, Tt, ncls = 8, 8, 4, 16, 16, 2
    alpha, beta = 0.5, 1.0

    key = jax.random.PRNGKey(0)
    k1, k2, k3, k4 = jax.random.split(key, 4)
    out_conv_source = jax.random.normal(k1, (Ns, C, Ts), jnp.float32)
    out_conv_target = jax.random.normal(k2, (Nt, C, Tt), jnp.float32)
    labels_source = (jnp.arange(Ns) % ncls).astype(jnp.int32)
    similarity_CE = jax.random.uniform(k3, (Ns, Nt), jnp.float32)

    # Deterministic synthetic OT coupling and per-class DTW alignment plans
    # (stand-ins for the outputs of the external MAD solver).
    OT = jnp.ones((Ns, Nt), jnp.float32) / float(Ns * Nt)
    DTW = (jax.random.uniform(k4, (ncls, Ts, Tt)) > 0.5).astype(jnp.float32)

    alpha_loss, beta_loss, OT_out, DTW_out = mad_loss_forward(
        out_conv_source, out_conv_target, labels_source, similarity_CE,
        OT, DTW, alpha=alpha, beta=beta, MAD_class=True)
    jax.block_until_ready((alpha_loss, beta_loss, OT_out, DTW_out))

    ref_alpha, ref_beta = _reference(out_conv_source, out_conv_target, labels_source,
                                     similarity_CE, OT, DTW, alpha, beta)
    # Tolerance covers bf16 MXU operands in the kernel's Gram contraction vs. the
    # default-precision plain-JAX reference.
    np.testing.assert_allclose(np.asarray(alpha_loss), np.asarray(ref_alpha),
                               rtol=2e-2, atol=2e-2)
    np.testing.assert_allclose(np.asarray(beta_loss), np.asarray(ref_beta),
                               rtol=1e-3, atol=1e-3)
    print("KERNEL_OK")
</pallas_src>

<mosaic_0001>
module attributes {stable_mosaic.version = 11 : i64} {
  func.func @_mad_class_kernel(%arg0: i32, %arg1: memref<1x16x32xbf16, #tpu.memory_space<vmem>>, %arg2: memref<1x32x16xbf16, #tpu.memory_space<vmem>>, %arg3: memref<1x16x16xf32, #tpu.memory_space<vmem>>, %arg4: memref<1x1x16xf32, #tpu.memory_space<vmem>>, %arg5: memref<1x1x16xf32, #tpu.memory_space<vmem>>, %arg6: memref<1x1x1xf32, #tpu.memory_space<vmem>>) attributes {dimension_semantics = [#tpu.dimension_semantics<parallel>], iteration_bounds = array<i64: 2>, scalar_prefetch = 0 : i64, scratch_operands = 0 : i64, tpu.core_type = #tpu.core_type<tc>, window_params = [{transform_indices = @transform_0, window_bounds = array<i64: 1, 16, 32>}, {transform_indices = @transform_1, window_bounds = array<i64: 1, 32, 16>}, {transform_indices = @transform_2, window_bounds = array<i64: 1, 16, 16>}, {transform_indices = @transform_3, window_bounds = array<i64: 1, 1, 16>}, {transform_indices = @transform_4, window_bounds = array<i64: 1, 1, 16>}, {transform_indices = @transform_5, window_bounds = array<i64: 1, 1, 1>}]} {
    %c0 = arith.constant 0 : index
    %c0_0 = arith.constant 0 : index
    %c0_1 = arith.constant 0 : index
    %0 = vector.load %arg1[%c0, %c0_0, %c0_1] : memref<1x16x32xbf16, #tpu.memory_space<vmem>>, vector<1x16x32xbf16>
    %1 = vector.shape_cast %0 : vector<1x16x32xbf16> to vector<16x32xbf16>
    %c0_2 = arith.constant 0 : index
    %c0_3 = arith.constant 0 : index
    %c0_4 = arith.constant 0 : index
    %2 = vector.load %arg2[%c0_2, %c0_3, %c0_4] : memref<1x32x16xbf16, #tpu.memory_space<vmem>>, vector<1x32x16xbf16>
    %3 = vector.shape_cast %2 : vector<1x32x16xbf16> to vector<32x16xbf16>
    %cst = arith.constant dense<0.000000e+00> : vector<16x16xf32>
    %4 = tpu.matmul %1, %3, %cst {dimension_numbers = #tpu.dot_dimension_numbers<[1], [0], [0], [1], [0, 0, 1, 1], [], []>} : vector<16x32xbf16>, vector<32x16xbf16>, vector<16x16xf32> -> vector<16x16xf32>
    %c0_5 = arith.constant 0 : index
    %c0_6 = arith.constant 0 : index
    %c0_7 = arith.constant 0 : index
    %5 = vector.load %arg3[%c0_5, %c0_6, %c0_7] : memref<1x16x16xf32, #tpu.memory_space<vmem>>, vector<1x16x16xf32>
    %6 = vector.shape_cast %5 : vector<1x16x16xf32> to vector<16x16xf32>
    %7 = arith.mulf %4, %6 : vector<16x16xf32>
    %cst_8 = arith.constant dense<0.000000e+00> : vector<16xf32>
    %8 = vector.multi_reduction <add>, %7, %cst_8 [1] : vector<16x16xf32> to vector<16xf32>
    %9 = vector.shape_cast %8 : vector<16xf32> to vector<16x1xf32>
    %cst_9 = arith.constant dense<0.000000e+00> : vector<1xf32>
    %10 = vector.multi_reduction <add>, %9, %cst_9 [0] : vector<16x1xf32> to vector<1xf32>
    %11 = vector.shape_cast %10 : vector<1xf32> to vector<1x1xf32>
    %c0_10 = arith.constant 0 : index
    %c0_11 = arith.constant 0 : index
    %c0_12 = arith.constant 0 : index
    %12 = vector.load %arg4[%c0_10, %c0_11, %c0_12] : memref<1x1x16xf32, #tpu.memory_space<vmem>>, vector<1x1x16xf32>
    %13 = vector.shape_cast %12 : vector<1x1x16xf32> to vector<1x16xf32>
    %cst_13 = arith.constant dense<0.000000e+00> : vector<1xf32>
    %14 = vector.multi_reduction <add>, %13, %cst_13 [1] : vector<1x16xf32> to vector<1xf32>
    %15 = vector.shape_cast %14 : vector<1xf32> to vector<1x1xf32>
    %c0_14 = arith.constant 0 : index
    %c0_15 = arith.constant 0 : index
    %c0_16 = arith.constant 0 : index
    %16 = vector.load %arg5[%c0_14, %c0_15, %c0_16] : memref<1x1x16xf32, #tpu.memory_space<vmem>>, vector<1x1x16xf32>
    %17 = vector.shape_cast %16 : vector<1x1x16xf32> to vector<1x16xf32>
    %cst_17 = arith.constant dense<0.000000e+00> : vector<1xf32>
    %18 = vector.multi_reduction <add>, %17, %cst_17 [1] : vector<1x16xf32> to vector<1xf32>
    %19 = vector.shape_cast %18 : vector<1xf32> to vector<1x1xf32>
    %20 = arith.addf %15, %19 : vector<1x1xf32>
    %cst_18 = arith.constant 2.000000e+00 : f32
    %21 = vector.broadcast %cst_18 : f32 to vector<1x1xf32>
    %22 = arith.mulf %21, %11 : vector<1x1xf32>
    %23 = arith.subf %20, %22 : vector<1x1xf32>
    %c0_19 = arith.constant 0 : index
    %c0_20 = arith.constant 0 : index
    %c0_21 = arith.constant 0 : index
    %24 = vector.load %arg6[%c0_19, %c0_20, %c0_21] : memref<1x1x1xf32, #tpu.memory_space<vmem>>, vector<1x1x1xf32>
    %25 = vector.shape_cast %24 : vector<1x1x1xf32> to vector<1x1xf32>
    %26 = vector.shape_cast %23 : vector<1x1xf32> to vector<1x1x1xf32>
    tpu.vector_store %arg6[%c0_19, %c0_20, %c0_21], %26 {strides = array<i32>} : memref<1x1x1xf32, #tpu.memory_space<vmem>>, vector<1x1x1xf32>,
    return
  }
  func.func @transform_0(%arg0: i32) -> (i32, i32, i32) {
    %c0_i32 = arith.constant 0 : i32
    %c0_i32_0 = arith.constant 0 : i32
    %c0_i32_1 = arith.constant 0 : i32
    return %arg0, %c0_i32, %c0_i32_0 : i32, i32, i32
  }
  func.func @transform_1(%arg0: i32) -> (i32, i32, i32) {
    %c0_i32 = arith.constant 0 : i32
    %c0_i32_0 = arith.constant 0 : i32
    %c0_i32_1 = arith.constant 0 : i32
    return %arg0, %c0_i32, %c0_i32_0 : i32, i32, i32
  }
  func.func @transform_2(%arg0: i32) -> (i32, i32, i32) {
    %c0_i32 = arith.constant 0 : i32
    %c0_i32_0 = arith.constant 0 : i32
    %c0_i32_1 = arith.constant 0 : i32
    return %arg0, %c0_i32, %c0_i32_0 : i32, i32, i32
  }
  func.func @transform_3(%arg0: i32) -> (i32, i32, i32) {
    %c0_i32 = arith.constant 0 : i32
    %c0_i32_0 = arith.constant 0 : i32
    %c0_i32_1 = arith.constant 0 : i32
    return %arg0, %c0_i32, %c0_i32_0 : i32, i32, i32
  }
  func.func @transform_4(%arg0: i32) -> (i32, i32, i32) {
    %c0_i32 = arith.constant 0 : i32
    %c0_i32_0 = arith.constant 0 : i32
    %c0_i32_1 = arith.constant 0 : i32
    return %arg0, %c0_i32, %c0_i32_0 : i32, i32, i32
  }
  func.func @transform_5(%arg0: i32) -> (i32, i32, i32) {
    %c0_i32 = arith.constant 0 : i32
    %c0_i32_0 = arith.constant 0 : i32
    %c0_i32_1 = arith.constant 0 : i32
    return %arg0, %c0_i32, %c0_i32_0 : i32, i32, i32
  }
}

</mosaic_0001>

<llo_original>
// kernel: tpu_custom_call.1
$region0: #{tpu_custom_call.1}
  #allocation0 [shape = 'u32[]', space=smem, size = 0x4, offset = 0x4, fixed_abs, tag = 'smem constant byte address 0x4 - core index']
  #allocation1 [shape = 'u32[72,128]{1,0:T(1,128)}', space=vmem, size = 0x9000, scoped, tag = 'internal scratch']
  %s0 = inlined_call_operand.vmem [shape: bf16[2,16,32], index: 0, kind: input, shape index: {}]
  %s1 = inlined_call_operand.vmem [shape: bf16[2,32,16], index: 1, kind: input, shape index: {}]
  %s2 = inlined_call_operand.vmem [shape: f32[2,16,16], index: 2, kind: input, shape index: {}]
  %s3 = inlined_call_operand.vmem [shape: f32[2,1,16], index: 3, kind: input, shape index: {}]
  %s4 = inlined_call_operand.hbm [shape: f32[2,1,16], index: 4, kind: input, shape index: {}]
  %s5 = inlined_call_operand.vmem [shape: f32[2,1,1], index: 5, kind: output, shape index: {}]
  %s6 = sld [smem:[#allocation0]]
  $region57: #{tpu_custom_call.1} parent=0
    _
  %s8 = ssub.s32 1, %s6
  %s9 = scalar_select 0, %s8, %s6
  $region1: #{tpu_custom_call.1} parent=0
    #allocation2 [shape = 'u8[1024]{0}', space=vmem, size = 0x400, scoped, tag = 'input window, operand 4']
    #allocation3 [shape = 's32[2]{0}', space=sflag, size = 0x8, scoped, tag = 'scoped memory for tpu_custom_call.1']
    %10 = vsyncpa [#allocation3], 0
    %s11 = scalar_lea.sflag [#allocation3], 1
    %12 = vsyncpa %s11, 0
    loop: start=0, step=1, limit=4
    $region2: #{tpu_custom_call.1} parent=1 // loop_pre_header
      _
    $region3: #{tpu_custom_call.1} parent=1 // loop_header
      %s14 = sphi 0, %s18
      %p15 = scmp.ge.s32.totalorder %s14, 4
      %s24 = sphi 0, %s26
      %s27 = sphi 0, %s24
      %s28 = sphi 0, %s27
      %s44 = sphi 0, %s28
      %s50 = sphi 0, %s52
      %s53 = sphi 0, %s50
      %s54 = sphi 0, %s53
      %s70 = sphi 0, %s54
      %s76 = sphi 0, %s78
      %s79 = sphi 0, %s76
      %s80 = sphi 0, %s79
      %s96 = sphi 0, %s80
      %s102 = sphi 0, %s104
      %s105 = sphi 0, %s102
      %s106 = sphi 0, %s105
      %s122 = sphi 0, %s106
      %s128 = sphi 0, %s130
      %s131 = sphi 0, %s128
      %s132 = sphi 0, %s131
      %s148 = sphi 0, %s132
      %s154 = sphi 0, %s156
      %s157 = sphi 0, %s154
      %s158 = sphi 0, %s157
      %s174 = sphi 0, %s158
    $region4: #{tpu_custom_call.1} parent=1 // loop_header_branch
      %17 = sbr.rel (%p15) target = $region8
    $region5: #{tpu_custom_call.1} parent=1 // loop_body
      %s19 = ssub.s32 %s14, 1
      %s20 = ssub.s32 %s14, 2
      %s21 = sadd.s32 %s14, 1
      %s22 = ssub.s32 %s14, %s21
      %p23 = scmp.eq.s32.totalorder %s22, 0
      %s25 = sadd.s32 %s24, 1
      %s26 = scalar_select %p23, %s24, %s25
      %p29 = pneg %p23
      %p30 = scmp.eq.s32.totalorder %s14, 1
      %p31 = por %p29, %p30
      %p32 = scmp.ne.s32.totalorder %s24, %s27
      %p33 = scmp.eq.s32.totalorder %s14, 0
      %p34 = por %p32, %p33
      %p35 = scmp.ne.s32.totalorder %s24, %s27
      %p36 = scmp.eq.s32.totalorder %s19, 1
      %p37 = por %p35, %p36
      %p38 = scmp.ne.s32.totalorder %s27, %s28
      %p39 = scmp.eq.s32.totalorder %s19, 0
      %p40 = por %p38, %p39
      %p41 = scmp.ne.s32.totalorder %s27, %s28
      %p42 = scmp.eq.s32.totalorder %s20, 1
      %p43 = por %p41, %p42
      %p45 = scmp.ne.s32.totalorder %s28, %s44
      %p46 = scmp.eq.s32.totalorder %s20, 0
      %p47 = por %p45, %p46
      %s48 = ssub.s32 %s14, %s21
      %p49 = scmp.eq.s32.totalorder %s48, 0
      %s51 = sadd.s32 %s50, 1
      %s52 = scalar_select %p49, %s50, %s51
      %p55 = pneg %p49
      %p56 = scmp.eq.s32.totalorder %s14, 1
      %p57 = por %p55, %p56
      %p58 = scmp.ne.s32.totalorder %s50, %s53
      %p59 = scmp.eq.s32.totalorder %s14, 0
      %p60 = por %p58, %p59
      %p61 = scmp.ne.s32.totalorder %s50, %s53
      %p62 = scmp.eq.s32.totalorder %s19, 1
      %p63 = por %p61, %p62
      %p64 = scmp.ne.s32.totalorder %s53, %s54
      %p65 = scmp.eq.s32.totalorder %s19, 0
      %p66 = por %p64, %p65
      %p67 = scmp.ne.s32.totalorder %s53, %s54
      %p68 = scmp.eq.s32.totalorder %s20, 1
      %p69 = por %p67, %p68
      %p71 = scmp.ne.s32.totalorder %s54, %s70
      %p72 = scmp.eq.s32.totalorder %s20, 0
      %p73 = por %p71, %p72
      %s74 = ssub.s32 %s14, %s21
      %p75 = scmp.eq.s32.totalorder %s74, 0
      %s77 = sadd.s32 %s76, 1
      %s78 = scalar_select %p75, %s76, %s77
      %p81 = pneg %p75
      %p82 = scmp.eq.s32.totalorder %s14, 1
      %p83 = por %p81, %p82
      %p84 = scmp.ne.s32.totalorder %s76, %s79
      %p85 = scmp.eq.s32.totalorder %s14, 0
      %p86 = por %p84, %p85
      %p87 = scmp.ne.s32.totalorder %s76, %s79
      %p88 = scmp.eq.s32.totalorder %s19, 1
      %p89 = por %p87, %p88
      %p90 = scmp.ne.s32.totalorder %s79, %s80
      %p91 = scmp.eq.s32.totalorder %s19, 0
      %p92 = por %p90, %p91
      %p93 = scmp.ne.s32.totalorder %s79, %s80
      %p94 = scmp.eq.s32.totalorder %s20, 1
      %p95 = por %p93, %p94
      %p97 = scmp.ne.s32.totalorder %s80, %s96
      %p98 = scmp.eq.s32.totalorder %s20, 0
      %p99 = por %p97, %p98
      %s100 = ssub.s32 %s14, %s21
      %p101 = scmp.eq.s32.totalorder %s100, 0
      %s103 = sadd.s32 %s102, 1
      %s104 = scalar_select %p101, %s102, %s103
      %p107 = pneg %p101
      %p108 = scmp.eq.s32.totalorder %s14, 1
      %p109 = por %p107, %p108
      %p110 = scmp.ne.s32.totalorder %s102, %s105
      %p111 = scmp.eq.s32.totalorder %s14, 0
      %p112 = por %p110, %p111
      %p113 = scmp.ne.s32.totalorder %s102, %s105
      %p114 = scmp.eq.s32.totalorder %s19, 1
      %p115 = por %p113, %p114
      %p116 = scmp.ne.s32.totalorder %s105, %s106
      %p117 = scmp.eq.s32.totalorder %s19, 0
      %p118 = por %p116, %p117
      %p119 = scmp.ne.s32.totalorder %s105, %s106
      %p120 = scmp.eq.s32.totalorder %s20, 1
      %p121 = por %p119, %p120
      %p123 = scmp.ne.s32.totalorder %s106, %s122
      %p124 = scmp.eq.s32.totalorder %s20, 0
      %p125 = por %p123, %p124
      %s126 = ssub.s32 %s14, %s21
      %p127 = scmp.eq.s32.totalorder %s126, 0
      %s129 = sadd.s32 %s128, 1
      %s130 = scalar_select %p127, %s128, %s129
      %p133 = pneg %p127
      %p134 = scmp.eq.s32.totalorder %s14, 1
      %p135 = por %p133, %p134
      %p136 = scmp.ne.s32.totalorder %s128, %s131
      %p137 = scmp.eq.s32.totalorder %s14, 0
      %p138 = por %p136, %p137
      %p139 = scmp.ne.s32.totalorder %s128, %s131
      %p140 = scmp.eq.s32.totalorder %s19, 1
      %p141 = por %p139, %p140
      %p142 = scmp.ne.s32.totalorder %s131, %s132
      %p143 = scmp.eq.s32.totalorder %s19, 0
      %p144 = por %p142, %p143
      %p145 = scmp.ne.s32.totalorder %s131, %s132
      %p146 = scmp.eq.s32.totalorder %s20, 1
      %p147 = por %p145, %p146
      %p149 = scmp.ne.s32.totalorder %s132, %s148
      %p150 = scmp.eq.s32.totalorder %s20, 0
      %p151 = por %p149, %p150
      %s152 = ssub.s32 %s14, %s21
      %p153 = scmp.eq.s32.totalorder %s152, 0
      %s155 = sadd.s32 %s154, 1
      %s156 = scalar_select %p153, %s154, %s155
      %p159 = pneg %p153
      %p160 = scmp.eq.s32.totalorder %s14, 1
      %p161 = por %p159, %p160
      %p162 = scmp.ne.s32.totalorder %s154, %s157
      %p163 = scmp.eq.s32.totalorder %s14, 0
      %p164 = por %p162, %p163
      %p165 = scmp.ne.s32.totalorder %s154, %s157
      %p166 = scmp.eq.s32.totalorder %s19, 1
      %p167 = por %p165, %p166
      %p168 = scmp.ne.s32.totalorder %s157, %s158
      %p169 = scmp.eq.s32.totalorder %s19, 0
      %p170 = por %p168, %p169
      %p171 = scmp.ne.s32.totalorder %s157, %s158
      %p172 = scmp.eq.s32.totalorder %s20, 1
      %p173 = por %p171, %p172
      %p175 = scmp.ne.s32.totalorder %s158, %s174
      %p176 = scmp.eq.s32.totalorder %s20, 0
      %p177 = por %p175, %p176
      %p178 = scmp.le.s32.totalorder 1, %s14
      %p179 = scmp.lt.s32.totalorder %s14, 3
      %p180 = pnand %p178, %p179
      %p181 = pneg %p180
      // Predicated region
      $region9: #{tpu_custom_call.1} parent=5 // pred_check
        _
      $region10: #{tpu_custom_call.1} parent=5 // pred_check_branch
        %183 = sbr.rel (%p180) target = $region12
      $region11: #{tpu_custom_call.1} parent=5 // pred_region
        %s184 = ssub.s32 %s14, 1
      $region12: #{tpu_custom_call.1} parent=5 // pred_fallthru
        _
      %p185 = scmp.lt.s32.totalorder %s14, 2
      // Predicated region
      $region13: #{tpu_custom_call.1} parent=5 // pred_check
        %p186 = pneg %p185
      $region14: #{tpu_custom_call.1} parent=5 // pred_check_branch
        %188 = sbr.rel (%p186) target = $region16
      $region15: #{tpu_custom_call.1} parent=5 // pred_region
        // Predicated region
        $region17: #{tpu_custom_call.1} parent=15 // pred_check
          %p189 = pneg %p34
        $region18: #{tpu_custom_call.1} parent=15 // pred_check_branch
          %191 = sbr.rel (%p189) target = $region20
        $region19: #{tpu_custom_call.1} parent=15 // pred_region
          %p192 = scmp.lt.s32.totalorder %s14, 1
          %s193 = scalar_select %p192, %s14, 1
          %s194 = smul.addr %s193, 2
          %s195 = smul.addr %s194, 4
          %s196 = scalar_lea.vmem %s0, %s195
        $region20: #{tpu_custom_call.1} parent=15 // pred_fallthru
          _
        // Predicated region
        $region21: #{tpu_custom_call.1} parent=15 // pred_check
          %p197 = pneg %p60
        $region22: #{tpu_custom_call.1} parent=15 // pred_check_branch
          %199 = sbr.rel (%p197) target = $region24
        $region23: #{tpu_custom_call.1} parent=15 // pred_region
          %p200 = scmp.lt.s32.totalorder %s14, 1
          %s201 = scalar_select %p200, %s14, 1
          %s202 = smul.addr %s201, 4
          %s203 = smul.addr %s202, 4
          %s204 = scalar_lea.vmem %s1, %s203
        $region24: #{tpu_custom_call.1} parent=15 // pred_fallthru
          _
        // Predicated region
        $region25: #{tpu_custom_call.1} parent=15 // pred_check
          %p205 = pneg %p86
        $region26: #{tpu_custom_call.1} parent=15 // pred_check_branch
          %207 = sbr.rel (%p205) target = $region28
        $region27: #{tpu_custom_call.1} parent=15 // pred_region
          %p208 = scmp.lt.s32.totalorder %s14, 1
          %s209 = scalar_select %p208, %s14, 1
          %s210 = smul.addr %s209, 2
          %s211 = smul.addr %s210, 8
          %s212 = scalar_lea.vmem %s2, %s211
        $region28: #{tpu_custom_call.1} parent=15 // pred_fallthru
          _
        // Predicated region
        $region29: #{tpu_custom_call.1} parent=15 // pred_check
          %p213 = pneg %p112
        $region30: #{tpu_custom_call.1} parent=15 // pred_check_branch
          %215 = sbr.rel (%p213) target = $region32
        $region31: #{tpu_custom_call.1} parent=15 // pred_region
          %p216 = scmp.lt.s32.totalorder %s14, 1
          %s217 = scalar_select %p216, %s14, 1
          %s218 = scalar_lea.vmem %s3, %s217
        $region32: #{tpu_custom_call.1} parent=15 // pred_fallthru
          _
        // Predicated region
        $region33: #{tpu_custom_call.1} parent=15 // pred_check
          %p219 = pneg %p138
        $region34: #{tpu_custom_call.1} parent=15 // pred_check_branch
          %221 = sbr.rel (%p219) target = $region36
        $region35: #{tpu_custom_call.1} parent=15 // pred_region
          %s222 = sand.u32 %s128, 1
          %s223 = scalar_lea.sflag [#allocation3], %s222
          %s224 = sand.u32 %s128, 1
          %s225 = scalar_lea.vmem [#allocation2], %s224
          %227 = vsyncadd %s223, 0
          %s228 = scalar_lea.hbm %s4, %s14
          %s230 = sshll.u32 %s228, 4
          %s231 = int_to_ptr.hbm [resolvable:$true] %s230
          %s232 = sshll.u32 %s225, 4
          %s233 = int_to_ptr.vmem [resolvable:$true] %s232
          %235 = dma.hbm_to_vmem [thread:$0]  %s231, 16, %s233, %s223
        $region36: #{tpu_custom_call.1} parent=15 // pred_fallthru
          _
      $region16: #{tpu_custom_call.1} parent=5 // pred_fallthru
        _
      %p236 = scmp.le.s32.totalorder 1, %s14
      %p237 = scmp.lt.s32.totalorder %s14, 3
      %p238 = pnand %p236, %p237
      %p239 = pneg %p238
      // Predicated region
      $region37: #{tpu_custom_call.1} parent=5 // pred_check
        _
      $region38: #{tpu_custom_call.1} parent=5 // pred_check_branch
        %241 = sbr.rel (%p238) target = $region40
      $region39: #{tpu_custom_call.1} parent=5 // pred_region
        %s242 = ssub.s32 %s14, 1
        %s243 = sand.u32 %s131, 1
        %s244 = scalar_lea.sflag [#allocation3], %s243
        %s245 = sand.u32 %s131, 1
        %s246 = scalar_lea.vmem [#allocation2], %s245
        // Predicated region
        $region41: #{tpu_custom_call.1} parent=39 // pred_check
          %p247 = pneg %p144
        $region42: #{tpu_custom_call.1} parent=39 // pred_check_branch
          %249 = sbr.rel (%p247) target = $region44
        $region43: #{tpu_custom_call.1} parent=39 // pred_region
          %251 = dma.done %s244, 16
        $region44: #{tpu_custom_call.1} parent=39 // pred_fallthru
          _
        %p252 = scmp.lt.s32.totalorder %s19, 1
        %s253 = scalar_select %p252, %s19, 1
        %s254 = smul.addr %s253, 2
        %s255 = smul.addr %s254, 4
        %s256 = scalar_lea.vmem %s0, %s255
        %p257 = pneg %p40
        %p258 = pneg %p37
        %p259 = scmp.lt.s32.totalorder %s19, 1
        %s260 = scalar_select %p259, %s19, 1
        %s261 = smul.addr %s260, 4
        %s262 = smul.addr %s261, 4
        %s263 = scalar_lea.vmem %s1, %s262
        %p264 = pneg %p66
        %p265 = pneg %p63
        %p266 = scmp.lt.s32.totalorder %s19, 1
        %s267 = scalar_select %p266, %s19, 1
        %s268 = smul.addr %s267, 2
        %s269 = smul.addr %s268, 8
        %s270 = scalar_lea.vmem %s2, %s269
        %p271 = pneg %p92
        %p272 = pneg %p89
        %p273 = scmp.lt.s32.totalorder %s19, 1
        %s274 = scalar_select %p273, %s19, 1
        %s275 = scalar_lea.vmem %s3, %s274
        %p276 = pneg %p118
        %p277 = pneg %p115
        %s278 = sand.u32 %s131, 1
        %s279 = scalar_lea.sflag [#allocation3], %s278
        %s280 = sand.u32 %s131, 1
        %s281 = scalar_lea.vmem [#allocation2], %s280
        %p282 = pneg %p144
        %p283 = pneg %p141
        %p284 = pneg %p170
        %p285 = pneg %p167
        %p286 = scmp.lt.s32.totalorder %s19, 1
        %s287 = scalar_select %p286, %s19, 1
        %s288 = scalar_lea.vmem %s5, %s287
        %p289 = scmp.lt.s32.totalorder %s19, 1
        %s290 = scalar_select %p289, %s19, 1
        %s291 = smul.addr %s290, 2
        %s292 = smul.addr %s291, 4
        %s293 = scalar_lea.vmem %s0, %s292
        %p294 = scmp.lt.s32.totalorder %s19, 1
        %s295 = scalar_select %p294, %s19, 1
        %s296 = smul.addr %s295, 4
        %s297 = smul.addr %s296, 4
        %s298 = scalar_lea.vmem %s1, %s297
        %p299 = scmp.lt.s32.totalorder %s19, 1
        %s300 = scalar_select %p299, %s19, 1
        %s301 = smul.addr %s300, 2
        %s302 = smul.addr %s301, 8
        %s303 = scalar_lea.vmem %s2, %s302
        %p304 = scmp.lt.s32.totalorder %s19, 1
        %s305 = scalar_select %p304, %s19, 1
        %s306 = scalar_lea.vmem %s3, %s305
        %p307 = scmp.lt.s32.totalorder %s19, 1
        %s308 = scalar_select %p307, %s19, 1
        %s309 = scalar_lea.vmem %s5, %s308
        %v311 = vld [vmem:[%s293] sm:$0xf]
        %v312 = vld [vmem:[%s293 + $0x4] sm:$0xf]
        %v313 = vld [vmem:[%s298] sm:$0xf]
        %v314 = vld [vmem:[%s298 + $0x4] sm:$0xf]
        %v315 = vld [vmem:[%s298 + $0x8] sm:$0xf]
        %v316 = vld [vmem:[%s298 + $0xc] sm:$0xf]
        %v319 = vunpack.c.l.b16 %v311
        %v320 = vunpack.c.l.b16 %v312
        %v321 = vpack.c.b16 %v320, %v319
        %v326 = vunpack.c.l.b16 %v313
        %v327 = vunpack.c.l.b16 %v314
        %v328 = vunpack.c.l.b16 %v315
        %v329 = vunpack.c.l.b16 %v316
        %v330 = vpack.c.b16 %v327, %v326
        %v331 = vpack.c.b16 %v329, %v328
        %vm334 = vcmask 261120
        %v336 = vsel %vm334, %v321, 0
        %338 = vmatpush.bf16.msra.mxu0 0
        %339 = vmatpush.bf16.msra.mxu0 0
        %340 = vmatpush.bf16.msra.mxu0 0
        %341 = vmatpush.bf16.msra.mxu0 0
        %342 = vmatpush.bf16.msra.mxu0 0
        %343 = vmatpush.bf16.msra.mxu0 0
        %344 = vmatpush.bf16.msra.mxu0 %v331
        %345 = vmatpush.bf16.msra.mxu0 %v330
        %346 = vmatmul.bf16.gmra.mxu0 %v336
        %v347 = vpop.f32.mrf.mxu0
        %v348 = vadd.f32 0.0, %v347
        %v349 = vpop.f32.mrf.mxu0
        %v350 = vadd.f32 0.0, %v349
        %351 = vdwg.mxu0
        %v352 = vld [vmem:[%s303] sm:$0xff]
        %v353 = vld [vmem:[%s303 + $0x8] sm:$0xff]
        %v354 = vmul.f32 %v348, %v352
        %v355 = vmul.f32 %v350, %v353
        %vm356 = vcmask 130048
        %v357 = vsel %vm356, %v354, 0.0
        %358 = vadd.xlane.f32.xlu0 %v357
        %v359 = vpop.xlane.xlu0 %358
        %v360 = vsel %vm356, %v355, 0.0
        %361 = vadd.xlane.f32.xlu0 %v360
        %v362 = vpop.xlane.xlu0 %361
        %v363 = vadd.f32 %v359, %v362
        %v364 = vrot.slane %v363, 4
        %v365 = vadd.f32 %v363, %v364
        %v366 = vrot.slane %v365, 2
        %v367 = vadd.f32 %v365, %v366
        %v368 = vrot.slane %v367, 1
        %v369 = vadd.f32 %v367, %v368
        %v370 = vld [vmem:[%s306] sm:$0x1]
        %vm371 = vcmask 122880
        %v372 = vsel %vm371, %v370, 0.0
        %373 = vadd.xlane.f32.xlu0 %v372
        %v374 = vpop.xlane.xlu0 %373
        %v375 = vld [vmem:[%s246] sm:$0x1]
        %v376 = vsel %vm371, %v375, 0.0
        %377 = vadd.xlane.f32.xlu0 %v376
        %v378 = vpop.xlane.xlu0 %377
        %v379 = vadd.f32 %v374, %v378
        %v380 = vmul.f32 %v369, 2.0
        %v381 = vsub.f32 %v379, %v380
        %vm382 = vcmask 0
        %383 = vst.msk [vmem:[%s309] sm:$0x1] %vm382, %v381
        %p384 = scmp.lt.s32.totalorder %s19, 1
        %s385 = scalar_select %p384, %s19, 1
        %s386 = scalar_lea.vmem %s5, %s385
        // Predicated region
        $region45: #{tpu_custom_call.1} parent=39 // pred_check
          %p387 = pneg %p167
        $region46: #{tpu_custom_call.1} parent=39 // pred_check_branch
          %389 = sbr.rel (%p387) target = $region48
        $region47: #{tpu_custom_call.1} parent=39 // pred_region
          _
        $region48: #{tpu_custom_call.1} parent=39 // pred_fallthru
          _
      $region40: #{tpu_custom_call.1} parent=5 // pred_fallthru
        _
      %p390 = scmp.le.s32.totalorder 2, %s14
      // Predicated region
      $region49: #{tpu_custom_call.1} parent=5 // pred_check
        %p391 = pneg %p390
      $region50: #{tpu_custom_call.1} parent=5 // pred_check_branch
        %393 = sbr.rel (%p391) target = $region52
      $region51: #{tpu_custom_call.1} parent=5 // pred_region
        %s394 = ssub.s32 %s14, 2
        // Predicated region
        $region53: #{tpu_custom_call.1} parent=51 // pred_check
          %p395 = pneg %p173
        $region54: #{tpu_custom_call.1} parent=51 // pred_check_branch
          %397 = sbr.rel (%p395) target = $region56
        $region55: #{tpu_custom_call.1} parent=51 // pred_region
          %p398 = scmp.lt.s32.totalorder %s20, 1
          %s399 = scalar_select %p398, %s20, 1
          %s400 = scalar_lea.vmem %s5, %s399
        $region56: #{tpu_custom_call.1} parent=51 // pred_fallthru
          _
      $region52: #{tpu_custom_call.1} parent=5 // pred_fallthru
        _
    $region6: #{tpu_custom_call.1} parent=1 // loop_footer
      %s18 = sadd.s32 1, %s14
    $region7: #{tpu_custom_call.1} parent=1 // loop_footer_branch
      %13 = sbr.rel target = $region3
    $region8: #{tpu_custom_call.1} parent=1 // loop_exit
      _
    %401 = vsyncpa [#allocation3], 1
    %s402 = scalar_lea.sflag [#allocation3], 1
    %403 = vsyncpa %s402, 1

</llo_original>
